<compile_context>
chip_gen: v5e
topology: v5e:2x2
jax: 0.10.0
libtpu: 0.0.40
codegen_flags: <defaults>
</compile_context>

<pallas_src>
import math

import jax
import jax.numpy as jnp
from jax.experimental import pallas as pl
from jax.experimental.pallas import tpu as pltpu


# Whether pipeline_mode=pl.Buffered(1) (single-buffered resident weights) is
# supported by this jax/libtpu build; cleared on first lowering failure.
_SINGLE_BUFFER_OK = hasattr(pl, "Buffered")


def actor_kernel(maxaction_ref, s_ref, w1_ref, b1_ref, w2_ref, b2_ref,
                 w3_ref, b3_ref, out_ref):
    maxaction = maxaction_ref[0, 0]
    wdt = w1_ref.dtype  # f32 or bf16; all dots accumulate in f32 either way.

    # Layer 1: [Tb, S] @ [S, H] + [1, H] -> tanh
    a = jnp.tanh(
        jnp.dot(s_ref[...].astype(wdt), w1_ref[...],
                preferred_element_type=jnp.float32) + b1_ref[...])
    # Layer 2: [Tb, H] @ [H, H] + [1, H] -> tanh
    a = jnp.tanh(
        jnp.dot(a.astype(wdt), w2_ref[...],
                preferred_element_type=jnp.float32) + b2_ref[...])
    # Layer 3: [Tb, H] @ [H, A] + [1, A] -> tanh -> * maxaction
    out_ref[...] = (
        jnp.tanh(
            jnp.dot(a.astype(wdt), w3_ref[...],
                    preferred_element_type=jnp.float32) + b3_ref[...])
        * maxaction
    ).astype(out_ref.dtype)


def _round_up(x, m):
    return ((x + m - 1) // m) * m


def _pick_tile_b(batch, state_dim, net_width, action_dim, w_itemsize,
                 target_steps=2, vmem_budget=12 << 20):
    """Fewest, largest batch tiles that fit comfortably in scoped VMEM.

    target_steps=2 keeps both v7x TensorCores fed via the "parallel" grid
    axis while costing only one extra ~0.35us step on single-TC v5e/v6e.
    The budget is sized against the smallest default scoped-VMEM limit
    (16 MiB on v5e), so vmem_limit_bytes never needs raising.
    """
    if batch <= 128:
        return batch  # one step, whole batch (block == full dim is legal)
    spad = max(_round_up(state_dim, 128), 128)
    hpad = max(_round_up(net_width, 128), 128)
    apad = max(_round_up(action_dim, 128), 128)
    # Resident weights/biases (assume worst-case double-buffered) plus
    # per-row activation traffic: in/out tiles are double-buffered by the
    # pipeline; hidden-layer temporaries ~3 copies is a conservative bound.
    weight_bytes = (w_itemsize * (spad * hpad + hpad * hpad + hpad * apad)
                    + 4 * (2 * hpad + apad))
    row_bytes = 4 * (2 * spad + 3 * hpad + 2 * apad)
    avail = max(vmem_budget - 2 * weight_bytes, row_bytes * 128)
    max_tile = max(128, (avail // row_bytes) // 128 * 128)
    tile = _round_up(pl.cdiv(batch, target_steps), 128)
    return min(tile, max_tile)


def _resident_spec(shape, single_buffer):
    # Constant-index blocks never change across grid steps; a single VMEM
    # buffer halves their footprint (matters at realistic net_width on v7x).
    if single_buffer:
        return pl.BlockSpec(shape, lambda i: (0, 0),
                            pipeline_mode=pl.Buffered(1))
    return pl.BlockSpec(shape, lambda i: (0, 0))


def _actor_xla(state, w1, b1, w2, b2, w3, b3, maxaction):
    """Plain-XLA path with the same numerics as the kernel."""
    wdt = w1.dtype
    a = jnp.tanh(jnp.dot(state.astype(wdt), w1,
                         preferred_element_type=jnp.float32) + b1)
    a = jnp.tanh(jnp.dot(a.astype(wdt), w2,
                         preferred_element_type=jnp.float32) + b2)
    return jnp.tanh(jnp.dot(a.astype(wdt), w3,
                            preferred_element_type=jnp.float32) + b3) * maxaction


def actor_forward(state, params, maxaction, *, tile_b=None,
                  min_pallas_batch=8, force_pallas=False):
    """state: [B, state_dim] f32; params: dict of (W[in,out], b[1,out])."""
    global _SINGLE_BUFFER_OK
    w1, b1, w2, b2, w3, b3 = (
        params["w1"], params["b1"], params["w2"], params["b2"],
        params["w3"], params["b3"],
    )
    batch, state_dim = state.shape
    net_width = w1.shape[1]
    action_dim = w3.shape[1]

    if batch < min_pallas_batch and not force_pallas:
        # Rollout-sized calls: custom-call + pipeline setup >> the math.
        return _actor_xla(state, w1, b1, w2, b2, w3, b3, maxaction)

    w_itemsize = jnp.dtype(w1.dtype).itemsize
    if tile_b is None:
        tile_b = _pick_tile_b(batch, state_dim, net_width, action_dim,
                              w_itemsize)
    grid = (pl.cdiv(batch, tile_b),)

    maxaction_arr = jnp.full((1, 1), maxaction, jnp.float32)

    flops = 2 * batch * (state_dim * net_width
                         + net_width * net_width
                         + net_width * action_dim)
    transcendentals = batch * (2 * net_width + action_dim)
    bytes_accessed = (w_itemsize * (state_dim * net_width
                                    + net_width * net_width
                                    + net_width * action_dim)
                      + 4 * (batch * state_dim + 2 * net_width + action_dim
                             + batch * action_dim))

    def _call(single_buffer):
        return pl.pallas_call(
            actor_kernel,
            out_shape=jax.ShapeDtypeStruct((batch, action_dim), jnp.float32),
            grid=grid,
            in_specs=[
                # maxaction scalar lives in SMEM.
                pl.BlockSpec(memory_space=pltpu.MemorySpace.SMEM),
                # Activations: tiled over batch, pipelined by BlockSpec.
                pl.BlockSpec((tile_b, state_dim), lambda i: (i, 0)),
                # Weights / biases: same block every step -> resident in VMEM.
                _resident_spec((state_dim, net_width), single_buffer),
                _resident_spec((1, net_width), single_buffer),
                _resident_spec((net_width, net_width), single_buffer),
                _resident_spec((1, net_width), single_buffer),
                _resident_spec((net_width, action_dim), single_buffer),
                _resident_spec((1, action_dim), single_buffer),
            ],
            out_specs=pl.BlockSpec((tile_b, action_dim), lambda i: (i, 0)),
            compiler_params=pltpu.CompilerParams(
                dimension_semantics=("parallel",)),
            cost_estimate=pl.CostEstimate(
                flops=flops,
                transcendentals=transcendentals,
                bytes_accessed=bytes_accessed),
        )(maxaction_arr, state, w1, b1, w2, b2, w3, b3)

    if _SINGLE_BUFFER_OK:
        try:
            return _call(True)
        except Exception:
            # pl.Buffered(1) not supported on this build; use default buffering.
            _SINGLE_BUFFER_OK = False
    return _call(False)


def prepare_params_bf16(params):
    """One-time cast of weights to bf16 for full-rate MXU (biases stay f32)."""
    out = dict(params)
    for k in ("w1", "w2", "w3"):
        out[k] = params[k].astype(jnp.bfloat16)
    return out


def init_linear(key, fan_in, fan_out):
    """PyTorch nn.Linear default init: U(-1/sqrt(fan_in), 1/sqrt(fan_in))."""
    kw, kb = jax.random.split(key)
    bound = 1.0 / math.sqrt(fan_in)
    # Stored as [in, out] so the kernel computes x @ W + b.
    w = jax.random.uniform(kw, (fan_in, fan_out), jnp.float32, -bound, bound)
    b = jax.random.uniform(kb, (1, fan_out), jnp.float32, -bound, bound)
    return w, b


def init_actor_params(key, state_dim, action_dim, net_width):
    k1, k2, k3 = jax.random.split(key, 3)
    w1, b1 = init_linear(k1, state_dim, net_width)
    w2, b2 = init_linear(k2, net_width, net_width)
    w3, b3 = init_linear(k3, net_width, action_dim)
    return {"w1": w1, "b1": b1, "w2": w2, "b2": b2, "w3": w3, "b3": b3}


def actor_reference(state, params, maxaction):
    a = jnp.tanh(state @ params["w1"] + params["b1"])
    a = jnp.tanh(a @ params["w2"] + params["b2"])
    return jnp.tanh(a @ params["w3"] + params["b3"]) * maxaction


if __name__ == "__main__":
    state_dim = 16
    action_dim = 4
    net_width = 32
    maxaction = 2.0

    key = jax.random.PRNGKey(0)
    k_params, k_small, k_big = jax.random.split(key, 3)
    params = init_actor_params(k_params, state_dim, action_dim, net_width)

    # 1) Small batch forced through the Pallas kernel (single grid step).
    batch = 2
    state = jax.random.normal(k_small, (batch, state_dim), jnp.float32)
    out = jax.block_until_ready(
        actor_forward(state, params, maxaction, force_pallas=True))
    ref = actor_reference(state, params, maxaction)
    assert out.shape == (batch, action_dim), out.shape
    assert jnp.allclose(out, ref, atol=1e-5, rtol=1e-5)

    # 2) Same batch through the tiny-batch XLA bypass.
    out_bypass = jax.block_until_ready(actor_forward(state, params, maxaction))
    assert jnp.allclose(out_bypass, ref, atol=1e-5, rtol=1e-5)

    # 3) Larger batch: two balanced 256-row tiles; "parallel" axis feeds both
    #    v7x TensorCores, weights stay resident in VMEM across steps.
    big_batch = 512
    state_big = jax.random.normal(k_big, (big_batch, state_dim), jnp.float32)
    out_big = jax.block_until_ready(actor_forward(state_big, params, maxaction))
    ref_big = actor_reference(state_big, params, maxaction)
    assert out_big.shape == (big_batch, action_dim), out_big.shape
    assert jnp.allclose(out_big, ref_big, atol=1e-5, rtol=1e-5)

    # 4) bf16-weight MXU path (weights cast once, f32 accumulation); compared
    #    against the f32 reference with a loosened tolerance.
    params_bf16 = prepare_params_bf16(params)
    out_bf16 = jax.block_until_ready(
        actor_forward(state_big, params_bf16, maxaction))
    assert out_bf16.shape == (big_batch, action_dim), out_bf16.shape
    assert jnp.allclose(out_bf16, ref_big, atol=5e-2, rtol=0.0)

    print("KERNEL_OK")
</pallas_src>

<mosaic_0001>
module attributes {stable_mosaic.version = 11 : i64} {
  func.func @actor_kernel(%arg0: i32, %arg1: memref<1x1xf32, #tpu.memory_space<smem>>, %arg2: memref<2x16xf32, #tpu.memory_space<vmem>>, %arg3: memref<16x32xf32, #tpu.memory_space<vmem>>, %arg4: memref<1x32xf32, #tpu.memory_space<vmem>>, %arg5: memref<32x32xf32, #tpu.memory_space<vmem>>, %arg6: memref<1x32xf32, #tpu.memory_space<vmem>>, %arg7: memref<32x4xf32, #tpu.memory_space<vmem>>, %arg8: memref<1x4xf32, #tpu.memory_space<vmem>>, %arg9: memref<2x4xf32, #tpu.memory_space<vmem>>) attributes {dimension_semantics = [#tpu.dimension_semantics<parallel>], iteration_bounds = array<i64: 1>, scalar_prefetch = 0 : i64, scratch_operands = 0 : i64, tpu.core_type = #tpu.core_type<tc>, window_params = [{transform_indices = @transform_0, window_bounds = array<i64: 1, 1>}, {transform_indices = @transform_1, window_bounds = array<i64: 2, 16>}, {pipeline_mode = #tpu.pipeline_mode<synchronous>, transform_indices = @transform_2, window_bounds = array<i64: 16, 32>}, {pipeline_mode = #tpu.pipeline_mode<synchronous>, transform_indices = @transform_3, window_bounds = array<i64: 1, 32>}, {pipeline_mode = #tpu.pipeline_mode<synchronous>, transform_indices = @transform_4, window_bounds = array<i64: 32, 32>}, {pipeline_mode = #tpu.pipeline_mode<synchronous>, transform_indices = @transform_5, window_bounds = array<i64: 1, 32>}, {pipeline_mode = #tpu.pipeline_mode<synchronous>, transform_indices = @transform_6, window_bounds = array<i64: 32, 4>}, {pipeline_mode = #tpu.pipeline_mode<synchronous>, transform_indices = @transform_7, window_bounds = array<i64: 1, 4>}, {transform_indices = @transform_8, window_bounds = array<i64: 2, 4>}]} {
    %c0 = arith.constant 0 : index
    %c0_0 = arith.constant 0 : index
    %0 = memref.load %arg1[%c0, %c0_0] : memref<1x1xf32, #tpu.memory_space<smem>>
    %c0_1 = arith.constant 0 : index
    %c0_2 = arith.constant 0 : index
    %1 = vector.load %arg2[%c0_1, %c0_2] : memref<2x16xf32, #tpu.memory_space<vmem>>, vector<2x16xf32>
    %c0_3 = arith.constant 0 : index
    %c0_4 = arith.constant 0 : index
    %2 = vector.load %arg3[%c0_3, %c0_4] : memref<16x32xf32, #tpu.memory_space<vmem>>, vector<16x32xf32>
    %cst = arith.constant dense<0.000000e+00> : vector<2x32xf32>
    %3 = tpu.matmul %1, %2, %cst {dimension_numbers = #tpu.dot_dimension_numbers<[1], [0], [0], [1], [0, 0, 1, 1], [], []>} : vector<2x16xf32>, vector<16x32xf32>, vector<2x32xf32> -> vector<2x32xf32>
    %c0_5 = arith.constant 0 : index
    %c0_6 = arith.constant 0 : index
    %4 = vector.load %arg4[%c0_5, %c0_6] : memref<1x32xf32, #tpu.memory_space<vmem>>, vector<1x32xf32>
    %5 = vector.broadcast %4 : vector<1x32xf32> to vector<2x32xf32>
    %6 = arith.addf %3, %5 : vector<2x32xf32>
    %7 = math.tanh %6 : vector<2x32xf32>
    %c0_7 = arith.constant 0 : index
    %c0_8 = arith.constant 0 : index
    %8 = vector.load %arg5[%c0_7, %c0_8] : memref<32x32xf32, #tpu.memory_space<vmem>>, vector<32x32xf32>
    %cst_9 = arith.constant dense<0.000000e+00> : vector<2x32xf32>
    %9 = tpu.matmul %7, %8, %cst_9 {dimension_numbers = #tpu.dot_dimension_numbers<[1], [0], [0], [1], [0, 0, 1, 1], [], []>} : vector<2x32xf32>, vector<32x32xf32>, vector<2x32xf32> -> vector<2x32xf32>
    %c0_10 = arith.constant 0 : index
    %c0_11 = arith.constant 0 : index
    %10 = vector.load %arg6[%c0_10, %c0_11] : memref<1x32xf32, #tpu.memory_space<vmem>>, vector<1x32xf32>
    %11 = vector.broadcast %10 : vector<1x32xf32> to vector<2x32xf32>
    %12 = arith.addf %9, %11 : vector<2x32xf32>
    %13 = math.tanh %12 : vector<2x32xf32>
    %c0_12 = arith.constant 0 : index
    %c0_13 = arith.constant 0 : index
    %14 = vector.load %arg7[%c0_12, %c0_13] : memref<32x4xf32, #tpu.memory_space<vmem>>, vector<32x4xf32>
    %cst_14 = arith.constant dense<0.000000e+00> : vector<2x4xf32>
    %15 = tpu.matmul %13, %14, %cst_14 {dimension_numbers = #tpu.dot_dimension_numbers<[1], [0], [0], [1], [0, 0, 1, 1], [], []>} : vector<2x32xf32>, vector<32x4xf32>, vector<2x4xf32> -> vector<2x4xf32>
    %c0_15 = arith.constant 0 : index
    %c0_16 = arith.constant 0 : index
    %16 = vector.load %arg8[%c0_15, %c0_16] : memref<1x4xf32, #tpu.memory_space<vmem>>, vector<1x4xf32>
    %17 = vector.broadcast %16 : vector<1x4xf32> to vector<2x4xf32>
    %18 = arith.addf %15, %17 : vector<2x4xf32>
    %19 = math.tanh %18 : vector<2x4xf32>
    %20 = vector.broadcast %0 : f32 to vector<2x4xf32>
    %21 = arith.mulf %19, %20 : vector<2x4xf32>
    %c0_17 = arith.constant 0 : index
    %c0_18 = arith.constant 0 : index
    %22 = vector.load %arg9[%c0_17, %c0_18] : memref<2x4xf32, #tpu.memory_space<vmem>>, vector<2x4xf32>
    tpu.vector_store %arg9[%c0_17, %c0_18], %21 {strides = array<i32>} : memref<2x4xf32, #tpu.memory_space<vmem>>, vector<2x4xf32>,
    return
  }
  func.func @transform_0(%arg0: i32) -> (i32, i32) {
    %c0_i32 = arith.constant 0 : i32
    %c0_i32_0 = arith.constant 0 : i32
    %c0_i32_1 = arith.constant 0 : i32
    return %c0_i32, %c0_i32_0 : i32, i32
  }
  func.func @transform_1(%arg0: i32) -> (i32, i32) {
    %c0_i32 = arith.constant 0 : i32
    %c0_i32_0 = arith.constant 0 : i32
    return %arg0, %c0_i32 : i32, i32
  }
  func.func @transform_2(%arg0: i32) -> (i32, i32) {
    %c0_i32 = arith.constant 0 : i32
    %c0_i32_0 = arith.constant 0 : i32
    %c0_i32_1 = arith.constant 0 : i32
    return %c0_i32, %c0_i32_0 : i32, i32
  }
  func.func @transform_3(%arg0: i32) -> (i32, i32) {
    %c0_i32 = arith.constant 0 : i32
    %c0_i32_0 = arith.constant 0 : i32
    %c0_i32_1 = arith.constant 0 : i32
    return %c0_i32, %c0_i32_0 : i32, i32
  }
  func.func @transform_4(%arg0: i32) -> (i32, i32) {
    %c0_i32 = arith.constant 0 : i32
    %c0_i32_0 = arith.constant 0 : i32
    %c0_i32_1 = arith.constant 0 : i32
    return %c0_i32, %c0_i32_0 : i32, i32
  }
  func.func @transform_5(%arg0: i32) -> (i32, i32) {
    %c0_i32 = arith.constant 0 : i32
    %c0_i32_0 = arith.constant 0 : i32
    %c0_i32_1 = arith.constant 0 : i32
    return %c0_i32, %c0_i32_0 : i32, i32
  }
  func.func @transform_6(%arg0: i32) -> (i32, i32) {
    %c0_i32 = arith.constant 0 : i32
    %c0_i32_0 = arith.constant 0 : i32
    %c0_i32_1 = arith.constant 0 : i32
    return %c0_i32, %c0_i32_0 : i32, i32
  }
  func.func @transform_7(%arg0: i32) -> (i32, i32) {
    %c0_i32 = arith.constant 0 : i32
    %c0_i32_0 = arith.constant 0 : i32
    %c0_i32_1 = arith.constant 0 : i32
    return %c0_i32, %c0_i32_0 : i32, i32
  }
  func.func @transform_8(%arg0: i32) -> (i32, i32) {
    %c0_i32 = arith.constant 0 : i32
    %c0_i32_0 = arith.constant 0 : i32
    return %arg0, %c0_i32 : i32, i32
  }
}

module attributes {stable_mosaic.version = 11 : i64} {
  func.func @actor_kernel(%arg0: i32, %arg1: memref<1x1xf32, #tpu.memory_space<smem>>, %arg2: memref<2x16xf32, #tpu.memory_space<vmem>>, %arg3: memref<16x32xf32, #tpu.memory_space<vmem>>, %arg4: memref<1x32xf32, #tpu.memory_space<vmem>>, %arg5: memref<32x32xf32, #tpu.memory_space<vmem>>, %arg6: memref<1x32xf32, #tpu.memory_space<vmem>>, %arg7: memref<32x4xf32, #tpu.memory_space<vmem>>, %arg8: memref<1x4xf32, #tpu.memory_space<vmem>>, %arg9: memref<2x4xf32, #tpu.memory_space<vmem>>) attributes {dimension_semantics = [#tpu.dimension_semantics<parallel>], iteration_bounds = array<i64: 1>, scalar_prefetch = 0 : i64, scratch_operands = 0 : i64, tpu.core_type = #tpu.core_type<tc>, window_params = [{transform_indices = @transform_0, window_bounds = array<i64: 1, 1>}, {transform_indices = @transform_1, window_bounds = array<i64: 2, 16>}, {pipeline_mode = #tpu.pipeline_mode<synchronous>, transform_indices = @transform_2, window_bounds = array<i64: 16, 32>}, {pipeline_mode = #tpu.pipeline_mode<synchronous>, transform_indices = @transform_3, window_bounds = array<i64: 1, 32>}, {pipeline_mode = #tpu.pipeline_mode<synchronous>, transform_indices = @transform_4, window_bounds = array<i64: 32, 32>}, {pipeline_mode = #tpu.pipeline_mode<synchronous>, transform_indices = @transform_5, window_bounds = array<i64: 1, 32>}, {pipeline_mode = #tpu.pipeline_mode<synchronous>, transform_indices = @transform_6, window_bounds = array<i64: 32, 4>}, {pipeline_mode = #tpu.pipeline_mode<synchronous>, transform_indices = @transform_7, window_bounds = array<i64: 1, 4>}, {transform_indices = @transform_8, window_bounds = array<i64: 2, 4>}]} {
    %c0 = arith.constant 0 : index
    %c0_0 = arith.constant 0 : index
    %0 = memref.load %arg1[%c0, %c0_0] : memref<1x1xf32, #tpu.memory_space<smem>>
    %c0_1 = arith.constant 0 : index
    %c0_2 = arith.constant 0 : index
    %1 = vector.load %arg2[%c0_1, %c0_2] : memref<2x16xf32, #tpu.memory_space<vmem>>, vector<2x16xf32>
    %c0_3 = arith.constant 0 : index
    %c0_4 = arith.constant 0 : index
    %2 = vector.load %arg3[%c0_3, %c0_4] : memref<16x32xf32, #tpu.memory_space<vmem>>, vector<16x32xf32>
    %cst = arith.constant dense<0.000000e+00> : vector<2x32xf32>
    %3 = tpu.matmul %1, %2, %cst {dimension_numbers = #tpu.dot_dimension_numbers<[1], [0], [0], [1], [0, 0, 1, 1], [], []>} : vector<2x16xf32>, vector<16x32xf32>, vector<2x32xf32> -> vector<2x32xf32>
    %c0_5 = arith.constant 0 : index
    %c0_6 = arith.constant 0 : index
    %4 = vector.load %arg4[%c0_5, %c0_6] : memref<1x32xf32, #tpu.memory_space<vmem>>, vector<1x32xf32>
    %5 = vector.broadcast %4 : vector<1x32xf32> to vector<2x32xf32>
    %6 = arith.addf %3, %5 : vector<2x32xf32>
    %7 = math.tanh %6 : vector<2x32xf32>
    %c0_7 = arith.constant 0 : index
    %c0_8 = arith.constant 0 : index
    %8 = vector.load %arg5[%c0_7, %c0_8] : memref<32x32xf32, #tpu.memory_space<vmem>>, vector<32x32xf32>
    %cst_9 = arith.constant dense<0.000000e+00> : vector<2x32xf32>
    %9 = tpu.matmul %7, %8, %cst_9 {dimension_numbers = #tpu.dot_dimension_numbers<[1], [0], [0], [1], [0, 0, 1, 1], [], []>} : vector<2x32xf32>, vector<32x32xf32>, vector<2x32xf32> -> vector<2x32xf32>
    %c0_10 = arith.constant 0 : index
    %c0_11 = arith.constant 0 : index
    %10 = vector.load %arg6[%c0_10, %c0_11] : memref<1x32xf32, #tpu.memory_space<vmem>>, vector<1x32xf32>
    %11 = vector.broadcast %10 : vector<1x32xf32> to vector<2x32xf32>
    %12 = arith.addf %9, %11 : vector<2x32xf32>
    %13 = math.tanh %12 : vector<2x32xf32>
    %c0_12 = arith.constant 0 : index
    %c0_13 = arith.constant 0 : index
    %14 = vector.load %arg7[%c0_12, %c0_13] : memref<32x4xf32, #tpu.memory_space<vmem>>, vector<32x4xf32>
    %cst_14 = arith.constant dense<0.000000e+00> : vector<2x4xf32>
    %15 = tpu.matmul %13, %14, %cst_14 {dimension_numbers = #tpu.dot_dimension_numbers<[1], [0], [0], [1], [0, 0, 1, 1], [], []>} : vector<2x32xf32>, vector<32x4xf32>, vector<2x4xf32> -> vector<2x4xf32>
    %c0_15 = arith.constant 0 : index
    %c0_16 = arith.constant 0 : index
    %16 = vector.load %arg8[%c0_15, %c0_16] : memref<1x4xf32, #tpu.memory_space<vmem>>, vector<1x4xf32>
    %17 = vector.broadcast %16 : vector<1x4xf32> to vector<2x4xf32>
    %18 = arith.addf %15, %17 : vector<2x4xf32>
    %19 = math.tanh %18 : vector<2x4xf32>
    %20 = vector.broadcast %0 : f32 to vector<2x4xf32>
    %21 = arith.mulf %19, %20 : vector<2x4xf32>
    %c0_17 = arith.constant 0 : index
    %c0_18 = arith.constant 0 : index
    %22 = vector.load %arg9[%c0_17, %c0_18] : memref<2x4xf32, #tpu.memory_space<vmem>>, vector<2x4xf32>
    tpu.vector_store %arg9[%c0_17, %c0_18], %21 {strides = array<i32>} : memref<2x4xf32, #tpu.memory_space<vmem>>, vector<2x4xf32>,
    return
  }
  func.func @transform_0(%arg0: i32) -> (i32, i32) {
    %c0_i32 = arith.constant 0 : i32
    %c0_i32_0 = arith.constant 0 : i32
    %c0_i32_1 = arith.constant 0 : i32
    return %c0_i32, %c0_i32_0 : i32, i32
  }
  func.func @transform_1(%arg0: i32) -> (i32, i32) {
    %c0_i32 = arith.constant 0 : i32
    %c0_i32_0 = arith.constant 0 : i32
    return %arg0, %c0_i32 : i32, i32
  }
  func.func @transform_2(%arg0: i32) -> (i32, i32) {
    %c0_i32 = arith.constant 0 : i32
    %c0_i32_0 = arith.constant 0 : i32
    %c0_i32_1 = arith.constant 0 : i32
    return %c0_i32, %c0_i32_0 : i32, i32
  }
  func.func @transform_3(%arg0: i32) -> (i32, i32) {
    %c0_i32 = arith.constant 0 : i32
    %c0_i32_0 = arith.constant 0 : i32
    %c0_i32_1 = arith.constant 0 : i32
    return %c0_i32, %c0_i32_0 : i32, i32
  }
  func.func @transform_4(%arg0: i32) -> (i32, i32) {
    %c0_i32 = arith.constant 0 : i32
    %c0_i32_0 = arith.constant 0 : i32
    %c0_i32_1 = arith.constant 0 : i32
    return %c0_i32, %c0_i32_0 : i32, i32
  }
  func.func @transform_5(%arg0: i32) -> (i32, i32) {
    %c0_i32 = arith.constant 0 : i32
    %c0_i32_0 = arith.constant 0 : i32
    %c0_i32_1 = arith.constant 0 : i32
    return %c0_i32, %c0_i32_0 : i32, i32
  }
  func.func @transform_6(%arg0: i32) -> (i32, i32) {
    %c0_i32 = arith.constant 0 : i32
    %c0_i32_0 = arith.constant 0 : i32
    %c0_i32_1 = arith.constant 0 : i32
    return %c0_i32, %c0_i32_0 : i32, i32
  }
  func.func @transform_7(%arg0: i32) -> (i32, i32) {
    %c0_i32 = arith.constant 0 : i32
    %c0_i32_0 = arith.constant 0 : i32
    %c0_i32_1 = arith.constant 0 : i32
    return %c0_i32, %c0_i32_0 : i32, i32
  }
  func.func @transform_8(%arg0: i32) -> (i32, i32) {
    %c0_i32 = arith.constant 0 : i32
    %c0_i32_0 = arith.constant 0 : i32
    return %arg0, %c0_i32 : i32, i32
  }
}

</mosaic_0001>

<llo_original>
// kernel: tpu_custom_call.1
$region0: #{tpu_custom_call.1}
  #allocation0 [shape = 'u32[]', space=smem, size = 0x4, offset = 0x4, fixed_abs, tag = 'smem constant byte address 0x4 - core index']
  #allocation1 [shape = 'u32[72,128]{1,0:T(1,128)}', space=vmem, size = 0x9000, scoped, tag = 'internal scratch']
  #allocation2 [shape = 'f32[1,1]{1,0:T(1,128)S(6)}', space=smem, size = 0x200, scoped, tag = 'scoped memory for tpu_custom_call.1']
  %s0 = inlined_call_operand.<no memory space> [shape: f32[1,1], index: 0, kind: input, shape index: {}]
  %s1 = inlined_call_operand.vmem [shape: f32[2,16], index: 1, kind: input, shape index: {}]
  %s2 = inlined_call_operand.hbm [shape: f32[16,32], index: 2, kind: input, shape index: {}]
  %s3 = inlined_call_operand.vmem [shape: f32[1,32], index: 3, kind: input, shape index: {}]
  %s4 = inlined_call_operand.vmem [shape: f32[32,32], index: 4, kind: input, shape index: {}]
  %s5 = inlined_call_operand.vmem [shape: f32[1,32], index: 5, kind: input, shape index: {}]
  %s6 = inlined_call_operand.vmem [shape: f32[32,4], index: 6, kind: input, shape index: {}]
  %s7 = inlined_call_operand.vmem [shape: f32[1,4], index: 7, kind: input, shape index: {}]
  %s8 = inlined_call_operand.hbm [shape: f32[2,4], index: 8, kind: output, shape index: {}]
  %s9 = sld [smem:[#allocation0]]
  $region46: #{tpu_custom_call.1} parent=0
    _
  %s11 = ssub.s32 1, %s9
  %s12 = scalar_select 0, %s11, %s9
  %13 = sst [smem:[#allocation2]] %s0
  $region1: #{tpu_custom_call.1} parent=0
    #allocation3 [shape = 'u8[8192]{0}', space=vmem, size = 0x2000, scoped, tag = 'input window, operand 2, single buffered']
    #allocation4 [shape = 's32[1]{0}', space=sflag, size = 0x4, scoped, tag = 'scoped memory for tpu_custom_call.1']
    #allocation5 [shape = 's32[1]{0}', space=sflag, size = 0x4, scoped, tag = 'scoped memory for tpu_custom_call.1']
    #allocation6 [shape = 'u8[1024]{0}', space=vmem, size = 0x400, scoped, tag = 'output window, operand 0, single buffered']
    %14 = vsyncpa [#allocation4], 0
    %15 = vsyncpa [#allocation5], 0
    // Predicated region
    $region2: #{tpu_custom_call.1} parent=1 // pred_check
      _
    $region3: #{tpu_custom_call.1} parent=1 // pred_check_branch
      %17 = sbr.rel (0) target = $region5
    $region4: #{tpu_custom_call.1} parent=1 // pred_region
      _
    $region5: #{tpu_custom_call.1} parent=1 // pred_fallthru
      _
    // Predicated region
    $region6: #{tpu_custom_call.1} parent=1 // pred_check
      _
    $region7: #{tpu_custom_call.1} parent=1 // pred_check_branch
      %19 = sbr.rel (0) target = $region9
    $region8: #{tpu_custom_call.1} parent=1 // pred_region
      _
    $region9: #{tpu_custom_call.1} parent=1 // pred_fallthru
      _
    // Predicated region
    $region10: #{tpu_custom_call.1} parent=1 // pred_check
      _
    $region11: #{tpu_custom_call.1} parent=1 // pred_check_branch
      %21 = sbr.rel (0) target = $region13
    $region12: #{tpu_custom_call.1} parent=1 // pred_region
      %23 = vsyncadd [#allocation4], 0
      %s24 = sshll.u32 %s2, 4
      %s25 = int_to_ptr.hbm [resolvable:$true] %s24
      %s26 = sshll.u32 [#allocation3], 4
      %s27 = int_to_ptr.vmem [resolvable:$true] %s26
      %32 = dma.hbm_to_vmem [thread:$0]  %s25, 256, %s27, [#allocation4], 128, 128, 8
    $region13: #{tpu_custom_call.1} parent=1 // pred_fallthru
      _
    // Predicated region
    $region14: #{tpu_custom_call.1} parent=1 // pred_check
      _
    $region15: #{tpu_custom_call.1} parent=1 // pred_check_branch
      %34 = sbr.rel (0) target = $region17
    $region16: #{tpu_custom_call.1} parent=1 // pred_region
      _
    $region17: #{tpu_custom_call.1} parent=1 // pred_fallthru
      _
    // Predicated region
    $region18: #{tpu_custom_call.1} parent=1 // pred_check
      _
    $region19: #{tpu_custom_call.1} parent=1 // pred_check_branch
      %36 = sbr.rel (0) target = $region21
    $region20: #{tpu_custom_call.1} parent=1 // pred_region
      _
    $region21: #{tpu_custom_call.1} parent=1 // pred_fallthru
      _
    // Predicated region
    $region22: #{tpu_custom_call.1} parent=1 // pred_check
      _
    $region23: #{tpu_custom_call.1} parent=1 // pred_check_branch
      %38 = sbr.rel (0) target = $region25
    $region24: #{tpu_custom_call.1} parent=1 // pred_region
      _
    $region25: #{tpu_custom_call.1} parent=1 // pred_fallthru
      _
    // Predicated region
    $region26: #{tpu_custom_call.1} parent=1 // pred_check
      _
    $region27: #{tpu_custom_call.1} parent=1 // pred_check_branch
      %40 = sbr.rel (0) target = $region29
    $region28: #{tpu_custom_call.1} parent=1 // pred_region
      _
    $region29: #{tpu_custom_call.1} parent=1 // pred_fallthru
      _
    // Predicated region
    $region30: #{tpu_custom_call.1} parent=1 // pred_check
      _
    $region31: #{tpu_custom_call.1} parent=1 // pred_check_branch
      %42 = sbr.rel (0) target = $region33
    $region32: #{tpu_custom_call.1} parent=1 // pred_region
      _
    $region33: #{tpu_custom_call.1} parent=1 // pred_fallthru
      _
    // Predicated region
    $region34: #{tpu_custom_call.1} parent=1 // pred_check
      _
    $region35: #{tpu_custom_call.1} parent=1 // pred_check_branch
      %44 = sbr.rel (0) target = $region37
    $region36: #{tpu_custom_call.1} parent=1 // pred_region
      %46 = dma.done [#allocation4], 256
    $region37: #{tpu_custom_call.1} parent=1 // pred_fallthru
      _
    %s47 = sld [smem:[#allocation2]]
    %v48 = vld [vmem:[%s1] sm:$0x3]
    %v49 = vld [vmem:[#allocation3] sm:$0xff]
    %v50 = vld [vmem:[#allocation3 + $0x8] sm:$0xff]
    %v51 = vld [vmem:[%s3] sm:$0x1]
    %v53 = vperm.slane %v51, 0
    %vm55 = vcmask 130048
    %v57 = vsel %vm55, %v48, 0
    %59 = vmatpush.msra.mxu0 0.0
    %60 = vmatpush.msra.mxu0 0.0
    %61 = vmatpush.msra.mxu0 0.0
    %62 = vmatpush.msra.mxu0 0.0
    %63 = vmatpush.msra.mxu0 0.0
    %64 = vmatpush.msra.mxu0 0.0
    %65 = vmatpush.msra.mxu0 0.0
    %66 = vmatpush.msra.mxu0 0.0
    %67 = vmatpush.msra.mxu0 0.0
    %68 = vmatpush.msra.mxu0 0.0
    %69 = vmatpush.msra.mxu0 0.0
    %70 = vmatpush.msra.mxu0 0.0
    %71 = vmatpush.msra.mxu0 0.0
    %72 = vmatpush.msra.mxu0 0.0
    %73 = vmatpush.msra.mxu0 %v50
    %74 = vmatpush.msra.mxu0 %v49
    %75 = vmatmul.f32.gmra.mxu0 %v57
    %v76 = vpop.f32.mrf.mxu0
    %v77 = vadd.f32 %v53, %v76
    %78 = vdwg.mxu0
    %v79 = vtanh.pop %v77
    %v80 = vld [vmem:[%s4] sm:$0xff]
    %v81 = vld [vmem:[%s4 + $0x8] sm:$0xff]
    %v82 = vld [vmem:[%s4 + $0x10] sm:$0xff]
    %v83 = vld [vmem:[%s4 + $0x18] sm:$0xff]
    %v84 = vld [vmem:[%s5] sm:$0x1]
    %v86 = vperm.slane %v84, 0
    %vm88 = vcmask 261120
    %v90 = vsel %vm88, %v79, 0
    %92 = vmatpush.msra.mxu0 0.0
    %93 = vmatpush.msra.mxu0 0.0
    %94 = vmatpush.msra.mxu0 0.0
    %95 = vmatpush.msra.mxu0 0.0
    %96 = vmatpush.msra.mxu0 0.0
    %97 = vmatpush.msra.mxu0 0.0
    %98 = vmatpush.msra.mxu0 0.0
    %99 = vmatpush.msra.mxu0 0.0
    %100 = vmatpush.msra.mxu0 0.0
    %101 = vmatpush.msra.mxu0 0.0
    %102 = vmatpush.msra.mxu0 0.0
    %103 = vmatpush.msra.mxu0 0.0
    %104 = vmatpush.msra.mxu0 %v83
    %105 = vmatpush.msra.mxu0 %v82
    %106 = vmatpush.msra.mxu0 %v81
    %107 = vmatpush.msra.mxu0 %v80
    %108 = vmatmul.f32.gmra.mxu0 %v90
    %v109 = vpop.f32.mrf.mxu0
    %v110 = vadd.f32 %v86, %v109
    %111 = vdwg.mxu0
    %v112 = vtanh.pop %v110
    %v113 = vld [vmem:[%s6] sm:$0xff]
    %v114 = vld [vmem:[%s6 + $0x8] sm:$0xff]
    %v115 = vld [vmem:[%s6 + $0x10] sm:$0xff]
    %v116 = vld [vmem:[%s6 + $0x18] sm:$0xff]
    %v117 = vld [vmem:[%s7] sm:$0x1]
    %v119 = vperm.slane %v117, 0
    %v122 = vsel %vm88, %v112, 0
    %124 = vmatpush.msra.mxu0 0.0
    %125 = vmatpush.msra.mxu0 0.0
    %126 = vmatpush.msra.mxu0 0.0
    %127 = vmatpush.msra.mxu0 0.0
    %128 = vmatpush.msra.mxu0 0.0
    %129 = vmatpush.msra.mxu0 0.0
    %130 = vmatpush.msra.mxu0 0.0
    %131 = vmatpush.msra.mxu0 0.0
    %132 = vmatpush.msra.mxu0 0.0
    %133 = vmatpush.msra.mxu0 0.0
    %134 = vmatpush.msra.mxu0 0.0
    %135 = vmatpush.msra.mxu0 0.0
    %136 = vmatpush.msra.mxu0 %v116
    %137 = vmatpush.msra.mxu0 %v115
    %138 = vmatpush.msra.mxu0 %v114
    %139 = vmatpush.msra.mxu0 %v113
    %140 = vmatmul.f32.gmra.mxu0 %v122
    %v141 = vpop.f32.mrf.mxu0
    %v142 = vadd.f32 %v119, %v141
    %143 = vdwg.mxu0
    %v144 = vtanh.pop %v142
    %v145 = vstv %s47
    %v146 = vmul.f32 %v144, %v145
    %vm147 = vcmask 25600
    %148 = vst.msk [vmem:[#allocation6] sm:$0x3] %vm147, %v146
    // Predicated region
    $region38: #{tpu_custom_call.1} parent=1 // pred_check
      _
    $region39: #{tpu_custom_call.1} parent=1 // pred_check_branch
      %150 = sbr.rel (0) target = $region41
    $region40: #{tpu_custom_call.1} parent=1 // pred_region
      %152 = vsyncadd [#allocation5], 0
      %s154 = sshll.u32 [#allocation6], 4
      %s155 = int_to_ptr.vmem [resolvable:$true] %s154
      %s156 = sshll.u32 %s8, 4
      %s157 = int_to_ptr.hbm [resolvable:$true] %s156
      %159 = dma.vmem_to_hbm [thread:$0]  %s155, 32, %s157, [#allocation5]
    $region41: #{tpu_custom_call.1} parent=1 // pred_fallthru
      _
    // Predicated region
    $region42: #{tpu_custom_call.1} parent=1 // pred_check
      _
    $region43: #{tpu_custom_call.1} parent=1 // pred_check_branch
      %161 = sbr.rel (0) target = $region45
    $region44: #{tpu_custom_call.1} parent=1 // pred_region
      %163 = dma.done [#allocation5], 32
    $region45: #{tpu_custom_call.1} parent=1 // pred_fallthru
      _
    %164 = vsyncpa [#allocation4], 1
    %165 = vsyncpa [#allocation5], 1

// kernel: tpu_custom_call.1
$region0: #{tpu_custom_call.1}
  #allocation0 [shape = 'u32[]', space=smem, size = 0x4, offset = 0x4, fixed_abs, tag = 'smem constant byte address 0x4 - core index']
  #allocation1 [shape = 'u32[72,128]{1,0:T(1,128)}', space=vmem, size = 0x9000, scoped, tag = 'internal scratch']
  #allocation2 [shape = 'f32[1,1]{1,0:T(1,128)S(6)}', space=smem, size = 0x200, scoped, tag = 'scoped memory for tpu_custom_call.1']
  %s0 = inlined_call_operand.<no memory space> [shape: f32[1,1], index: 0, kind: input, shape index: {}]
  %s1 = inlined_call_operand.vmem [shape: f32[2,16], index: 1, kind: input, shape index: {}]
  %s2 = inlined_call_operand.hbm [shape: f32[16,32], index: 2, kind: input, shape index: {}]
  %s3 = inlined_call_operand.vmem [shape: f32[1,32], index: 3, kind: input, shape index: {}]
  %s4 = inlined_call_operand.vmem [shape: f32[32,32], index: 4, kind: input, shape index: {}]
  %s5 = inlined_call_operand.vmem [shape: f32[1,32], index: 5, kind: input, shape index: {}]
  %s6 = inlined_call_operand.vmem [shape: f32[32,4], index: 6, kind: input, shape index: {}]
  %s7 = inlined_call_operand.vmem [shape: f32[1,4], index: 7, kind: input, shape index: {}]
  %s8 = inlined_call_operand.hbm [shape: f32[2,4], index: 8, kind: output, shape index: {}]
  %s9 = sld [smem:[#allocation0]]
  $region46: #{tpu_custom_call.1} parent=0
    _
  %s11 = ssub.s32 1, %s9
  %s12 = scalar_select 0, %s11, %s9
  %13 = sst [smem:[#allocation2]] %s0
  $region1: #{tpu_custom_call.1} parent=0
    #allocation3 [shape = 'u8[8192]{0}', space=vmem, size = 0x2000, scoped, tag = 'input window, operand 2, single buffered']
    #allocation4 [shape = 's32[1]{0}', space=sflag, size = 0x4, scoped, tag = 'scoped memory for tpu_custom_call.1']
    #allocation5 [shape = 's32[1]{0}', space=sflag, size = 0x4, scoped, tag = 'scoped memory for tpu_custom_call.1']
    #allocation6 [shape = 'u8[1024]{0}', space=vmem, size = 0x400, scoped, tag = 'output window, operand 0, single buffered']
    %14 = vsyncpa [#allocation4], 0
    %15 = vsyncpa [#allocation5], 0
    // Predicated region
    $region2: #{tpu_custom_call.1} parent=1 // pred_check
      _
    $region3: #{tpu_custom_call.1} parent=1 // pred_check_branch
      %17 = sbr.rel (0) target = $region5
    $region4: #{tpu_custom_call.1} parent=1 // pred_region
      _
    $region5: #{tpu_custom_call.1} parent=1 // pred_fallthru
      _
    // Predicated region
    $region6: #{tpu_custom_call.1} parent=1 // pred_check
      _
    $region7: #{tpu_custom_call.1} parent=1 // pred_check_branch
      %19 = sbr.rel (0) target = $region9
    $region8: #{tpu_custom_call.1} parent=1 // pred_region
      _
    $region9: #{tpu_custom_call.1} parent=1 // pred_fallthru
      _
    // Predicated region
    $region10: #{tpu_custom_call.1} parent=1 // pred_check
      _
    $region11: #{tpu_custom_call.1} parent=1 // pred_check_branch
      %21 = sbr.rel (0) target = $region13
    $region12: #{tpu_custom_call.1} parent=1 // pred_region
      %23 = vsyncadd [#allocation4], 0
      %s24 = sshll.u32 %s2, 4
      %s25 = int_to_ptr.hbm [resolvable:$true] %s24
      %s26 = sshll.u32 [#allocation3], 4
      %s27 = int_to_ptr.vmem [resolvable:$true] %s26
      %32 = dma.hbm_to_vmem [thread:$0]  %s25, 256, %s27, [#allocation4], 128, 128, 8
    $region13: #{tpu_custom_call.1} parent=1 // pred_fallthru
      _
    // Predicated region
    $region14: #{tpu_custom_call.1} parent=1 // pred_check
      _
    $region15: #{tpu_custom_call.1} parent=1 // pred_check_branch
      %34 = sbr.rel (0) target = $region17
    $region16: #{tpu_custom_call.1} parent=1 // pred_region
      _
    $region17: #{tpu_custom_call.1} parent=1 // pred_fallthru
      _
    // Predicated region
    $region18: #{tpu_custom_call.1} parent=1 // pred_check
      _
    $region19: #{tpu_custom_call.1} parent=1 // pred_check_branch
      %36 = sbr.rel (0) target = $region21
    $region20: #{tpu_custom_call.1} parent=1 // pred_region
      _
    $region21: #{tpu_custom_call.1} parent=1 // pred_fallthru
      _
    // Predicated region
    $region22: #{tpu_custom_call.1} parent=1 // pred_check
      _
    $region23: #{tpu_custom_call.1} parent=1 // pred_check_branch
      %38 = sbr.rel (0) target = $region25
    $region24: #{tpu_custom_call.1} parent=1 // pred_region
      _
    $region25: #{tpu_custom_call.1} parent=1 // pred_fallthru
      _
    // Predicated region
    $region26: #{tpu_custom_call.1} parent=1 // pred_check
      _
    $region27: #{tpu_custom_call.1} parent=1 // pred_check_branch
      %40 = sbr.rel (0) target = $region29
    $region28: #{tpu_custom_call.1} parent=1 // pred_region
      _
    $region29: #{tpu_custom_call.1} parent=1 // pred_fallthru
      _
    // Predicated region
    $region30: #{tpu_custom_call.1} parent=1 // pred_check
      _
    $region31: #{tpu_custom_call.1} parent=1 // pred_check_branch
      %42 = sbr.rel (0) target = $region33
    $region32: #{tpu_custom_call.1} parent=1 // pred_region
      _
    $region33: #{tpu_custom_call.1} parent=1 // pred_fallthru
      _
    // Predicated region
    $region34: #{tpu_custom_call.1} parent=1 // pred_check
      _
    $region35: #{tpu_custom_call.1} parent=1 // pred_check_branch
      %44 = sbr.rel (0) target = $region37
    $region36: #{tpu_custom_call.1} parent=1 // pred_region
      %46 = dma.done [#allocation4], 256
    $region37: #{tpu_custom_call.1} parent=1 // pred_fallthru
      _
    %s47 = sld [smem:[#allocation2]]
    %v48 = vld [vmem:[%s1] sm:$0x3]
    %v49 = vld [vmem:[#allocation3] sm:$0xff]
    %v50 = vld [vmem:[#allocation3 + $0x8] sm:$0xff]
    %v51 = vld [vmem:[%s3] sm:$0x1]
    %v53 = vperm.slane %v51, 0
    %vm55 = vcmask 130048
    %v57 = vsel %vm55, %v48, 0
    %59 = vmatpush.msra.mxu0 0.0
    %60 = vmatpush.msra.mxu0 0.0
    %61 = vmatpush.msra.mxu0 0.0
    %62 = vmatpush.msra.mxu0 0.0
    %63 = vmatpush.msra.mxu0 0.0
    %64 = vmatpush.msra.mxu0 0.0
    %65 = vmatpush.msra.mxu0 0.0
    %66 = vmatpush.msra.mxu0 0.0
    %67 = vmatpush.msra.mxu0 0.0
    %68 = vmatpush.msra.mxu0 0.0
    %69 = vmatpush.msra.mxu0 0.0
    %70 = vmatpush.msra.mxu0 0.0
    %71 = vmatpush.msra.mxu0 0.0
    %72 = vmatpush.msra.mxu0 0.0
    %73 = vmatpush.msra.mxu0 %v50
    %74 = vmatpush.msra.mxu0 %v49
    %75 = vmatmul.f32.gmra.mxu0 %v57
    %v76 = vpop.f32.mrf.mxu0
    %v77 = vadd.f32 %v53, %v76
    %78 = vdwg.mxu0
    %v79 = vtanh.pop %v77
    %v80 = vld [vmem:[%s4] sm:$0xff]
    %v81 = vld [vmem:[%s4 + $0x8] sm:$0xff]
    %v82 = vld [vmem:[%s4 + $0x10] sm:$0xff]
    %v83 = vld [vmem:[%s4 + $0x18] sm:$0xff]
    %v84 = vld [vmem:[%s5] sm:$0x1]
    %v86 = vperm.slane %v84, 0
    %vm88 = vcmask 261120
    %v90 = vsel %vm88, %v79, 0
    %92 = vmatpush.msra.mxu0 0.0
    %93 = vmatpush.msra.mxu0 0.0
    %94 = vmatpush.msra.mxu0 0.0
    %95 = vmatpush.msra.mxu0 0.0
    %96 = vmatpush.msra.mxu0 0.0
    %97 = vmatpush.msra.mxu0 0.0
    %98 = vmatpush.msra.mxu0 0.0
    %99 = vmatpush.msra.mxu0 0.0
    %100 = vmatpush.msra.mxu0 0.0
    %101 = vmatpush.msra.mxu0 0.0
    %102 = vmatpush.msra.mxu0 0.0
    %103 = vmatpush.msra.mxu0 0.0
    %104 = vmatpush.msra.mxu0 %v83
    %105 = vmatpush.msra.mxu0 %v82
    %106 = vmatpush.msra.mxu0 %v81
    %107 = vmatpush.msra.mxu0 %v80
    %108 = vmatmul.f32.gmra.mxu0 %v90
    %v109 = vpop.f32.mrf.mxu0
    %v110 = vadd.f32 %v86, %v109
    %111 = vdwg.mxu0
    %v112 = vtanh.pop %v110
    %v113 = vld [vmem:[%s6] sm:$0xff]
    %v114 = vld [vmem:[%s6 + $0x8] sm:$0xff]
    %v115 = vld [vmem:[%s6 + $0x10] sm:$0xff]
    %v116 = vld [vmem:[%s6 + $0x18] sm:$0xff]
    %v117 = vld [vmem:[%s7] sm:$0x1]
    %v119 = vperm.slane %v117, 0
    %v122 = vsel %vm88, %v112, 0
    %124 = vmatpush.msra.mxu0 0.0
    %125 = vmatpush.msra.mxu0 0.0
    %126 = vmatpush.msra.mxu0 0.0
    %127 = vmatpush.msra.mxu0 0.0
    %128 = vmatpush.msra.mxu0 0.0
    %129 = vmatpush.msra.mxu0 0.0
    %130 = vmatpush.msra.mxu0 0.0
    %131 = vmatpush.msra.mxu0 0.0
    %132 = vmatpush.msra.mxu0 0.0
    %133 = vmatpush.msra.mxu0 0.0
    %134 = vmatpush.msra.mxu0 0.0
    %135 = vmatpush.msra.mxu0 0.0
    %136 = vmatpush.msra.mxu0 %v116
    %137 = vmatpush.msra.mxu0 %v115
    %138 = vmatpush.msra.mxu0 %v114
    %139 = vmatpush.msra.mxu0 %v113
    %140 = vmatmul.f32.gmra.mxu0 %v122
    %v141 = vpop.f32.mrf.mxu0
    %v142 = vadd.f32 %v119, %v141
    %143 = vdwg.mxu0
    %v144 = vtanh.pop %v142
    %v145 = vstv %s47
    %v146 = vmul.f32 %v144, %v145
    %vm147 = vcmask 25600
    %148 = vst.msk [vmem:[#allocation6] sm:$0x3] %vm147, %v146
    // Predicated region
    $region38: #{tpu_custom_call.1} parent=1 // pred_check
      _
    $region39: #{tpu_custom_call.1} parent=1 // pred_check_branch
      %150 = sbr.rel (0) target = $region41
    $region40: #{tpu_custom_call.1} parent=1 // pred_region
      %152 = vsyncadd [#allocation5], 0
      %s154 = sshll.u32 [#allocation6], 4
      %s155 = int_to_ptr.vmem [resolvable:$true] %s154
      %s156 = sshll.u32 %s8, 4
      %s157 = int_to_ptr.hbm [resolvable:$true] %s156
      %159 = dma.vmem_to_hbm [thread:$0]  %s155, 32, %s157, [#allocation5]
    $region41: #{tpu_custom_call.1} parent=1 // pred_fallthru
      _
    // Predicated region
    $region42: #{tpu_custom_call.1} parent=1 // pred_check
      _
    $region43: #{tpu_custom_call.1} parent=1 // pred_check_branch
      %161 = sbr.rel (0) target = $region45
    $region44: #{tpu_custom_call.1} parent=1 // pred_region
      %163 = dma.done [#allocation5], 32
    $region45: #{tpu_custom_call.1} parent=1 // pred_fallthru
      _
    %164 = vsyncpa [#allocation4], 1
    %165 = vsyncpa [#allocation5], 1

</llo_original>
